<compile_context>
chip_gen: v6e
topology: v6e:2x2x1
jax: 0.10.0
libtpu: 0.0.40
codegen_flags: <defaults>
</compile_context>

<pallas_src>
import functools

import jax
import jax.numpy as jnp
from jax.experimental import pallas as pl
from jax.experimental.pallas import tpu as pltpu

LN_EPS = 1e-5  # nn.LayerNorm default


def _round_up(x, m):
    return ((x + m - 1) // m) * m


def _vmem_capacity_bytes():
    """Physical per-core VMEM; conservative 64 MiB (v7x) if unknown."""
    try:
        cap = getattr(pltpu.get_tpu_info(), "vmem_capacity_bytes", None)
        if cap:
            return int(cap)
    except Exception:
        pass
    return 64 << 20


def _pick_th(H, tile_h):
    """Largest multiple of 128 that divides H and is <= tile_h (else H)."""
    best = None
    t = 128
    while t <= min(tile_h, H):
        if H % t == 0:
            best = t
        t += 128
    return best if best is not None else H


def _layernorm_f32(x, gamma, beta):
    mean = jnp.mean(x, axis=-1, keepdims=True)
    centered = x - mean
    var = jnp.mean(centered * centered, axis=-1, keepdims=True)
    return centered * jax.lax.rsqrt(var + LN_EPS) * gamma + beta


def ffn_resident_kernel(x_ref, gamma_ref, beta_ref, w1_ref, b1_ref, w2_ref,
                        b2_ref, o_ref):
    """Path A: 1-D grid over row tiles; full W1/W2 stay VMEM-resident.

    x_ref:      (tm, D)  input rows
    gamma/beta: (1, D)   layernorm affine params
    w1_ref:     (D, H)   full first weight (constant index_map -> one DMA)
    b1_ref:     (1, H)
    w2_ref:     (H, D)   full second weight (constant index_map -> one DMA)
    b2_ref:     (1, D)
    o_ref:      (tm, D)  output rows (x + FFN(x))
    """
    xn = _layernorm_f32(x_ref[...].astype(jnp.float32),
                        gamma_ref[...].astype(jnp.float32),
                        beta_ref[...].astype(jnp.float32))
    # Keep dot inputs in the weights' dtype (bf16 -> full-rate MXU); f32 acc.
    h = jnp.dot(xn.astype(w1_ref.dtype), w1_ref[...],
                preferred_element_type=jnp.float32)
    h = h + b1_ref[...].astype(jnp.float32)
    h = h * jax.nn.sigmoid(h)  # SiLU (logistic on the EUP slot)
    # TODO(synk): dropout omitted (p=0 / eval semantics -> identity op).
    y = jnp.dot(h.astype(w2_ref.dtype), w2_ref[...],
                preferred_element_type=jnp.float32)
    y = y + b2_ref[...].astype(jnp.float32)
    # Re-read x from VMEM here instead of keeping it live across both matmuls.
    o_ref[...] = (x_ref[...].astype(jnp.float32) + y).astype(o_ref.dtype)


def ffn_tiled_kernel(x_ref, gamma_ref, beta_ref, w1_ref, b1_ref, w2_ref,
                     b2_ref, o_ref, xn_ref, acc_ref):
    """Path B: (row-tile, hidden-tile) grid with f32 accumulator.

    w1_ref: (D, th) slice, w2_ref: (th, D) slice, b1_ref: (1, th) slice.
    xn_ref: (tm, D) scratch (layernormed rows in matmul dtype).
    acc_ref: (tm, D) f32 accumulator, persistent across the hidden axis.
    """
    h_idx = pl.program_id(1)

    @pl.when(h_idx == 0)
    def _ln():
        xn = _layernorm_f32(x_ref[...].astype(jnp.float32),
                            gamma_ref[...].astype(jnp.float32),
                            beta_ref[...].astype(jnp.float32))
        xn_ref[...] = xn.astype(xn_ref.dtype)

    h = jnp.dot(xn_ref[...], w1_ref[...], preferred_element_type=jnp.float32)
    h = h + b1_ref[...].astype(jnp.float32)
    h = h * jax.nn.sigmoid(h)  # SiLU
    # TODO(synk): dropout omitted (p=0 / eval semantics -> identity op).
    partial = jnp.dot(h.astype(w2_ref.dtype), w2_ref[...],
                      preferred_element_type=jnp.float32)

    # First hidden step writes directly (b2 folded in) -- no zero-init + RMW.
    @pl.when(h_idx == 0)
    def _first():
        acc_ref[...] = partial + b2_ref[...].astype(jnp.float32)

    @pl.when(h_idx > 0)
    def _accum():
        acc_ref[...] += partial

    @pl.when(h_idx == pl.num_programs(1) - 1)
    def _finalize():
        o_ref[...] = (x_ref[...].astype(jnp.float32)
                      + acc_ref[...]).astype(o_ref.dtype)


@functools.partial(jax.jit,
                   static_argnames=("tile_m", "tile_h", "force_tiled"))
def feed_forward_block(x, gamma, beta, w1, b1, w2, b2, *,
                       tile_m=None, tile_h=512, force_tiled=False):
    B, T, D = x.shape
    H = w1.shape[1]
    M = B * T

    xbytes = jnp.dtype(x.dtype).itemsize
    wbytes = jnp.dtype(w1.dtype).itemsize
    row_align = 16  # bf16 sublane packing

    cap = _vmem_capacity_bytes()
    # Planning budget well below physical VMEM (v7x: only 64 MiB per TC).
    budget = max(min(cap * 3 // 4, cap - (8 << 20)), 16 << 20)

    weight_bytes = (w1.size + w2.size + b1.size + b2.size) * wbytes

    # ---- Path A candidate: fully VMEM-resident weights, 1-D row grid ----
    tm_res = 256 if tile_m is None else tile_m
    if M <= tm_res:
        # Split into >=2 row tiles when there is enough work so v7x's two
        # TensorCores both get a share; otherwise one (padded) tile.
        tm_res = (_round_up(-(-M // 2), 128) if M >= 256
                  else _round_up(M, row_align))
    else:
        tm_res = _round_up(tm_res, row_align)

    def resident_need(tm_):
        return (2 * weight_bytes              # weights (assume 2x buffering)
                + 4 * tm_ * D * xbytes        # x + out tiles, double-buffered
                + 2 * tm_ * H * 4             # f32 hidden staging in VMEM
                + 8 * D * xbytes              # gamma/beta
                + (4 << 20))                  # headroom

    use_resident = (not force_tiled) and resident_need(tm_res) <= budget

    if use_resident:
        tm = tm_res
        th = H
        need = resident_need(tm)
    else:
        # ---- Path B: hidden-dim reduction, weights re-streamed per row tile
        th = _pick_th(H, tile_h)
        # Big row tile keeps the re-streamed weight traffic above the HBM
        # roofline (intensity ~ tm flop/byte; v6e needs ~680).
        tm = 1024 if tile_m is None else tile_m
        tm = _round_up(min(tm, _round_up(M, row_align)), row_align)

        def tiled_need(tm_, th_):
            return (4 * tm_ * D * xbytes                # x + out, 2x buffered
                    + 4 * D * th_ * wbytes              # w1 + w2 slices, 2x
                    + 2 * (th_ + D) * wbytes            # b1 slice, b2
                    + tm_ * D * wbytes + tm_ * D * 4    # xn + acc scratch
                    + 2 * tm_ * th_ * 4                 # f32 hidden staging
                    + (4 << 20))                        # headroom

        while tm > 128 and tiled_need(tm, th) > budget:
            tm = _round_up(tm // 2, row_align)
        need = tiled_need(tm, th)

    Mp = _round_up(M, tm)
    n_row_tiles = Mp // tm

    x2d = x.reshape(M, D)
    if Mp != M:
        # Zero rows are safe through LayerNorm (eps > 0) and get sliced off.
        x2d = jnp.pad(x2d, ((0, Mp - M), (0, 0)))

    gamma2d = gamma.reshape(1, D)
    beta2d = beta.reshape(1, D)
    b1_2d = b1.reshape(1, H)
    b2_2d = b2.reshape(1, D)

    # Ask for what we need (+headroom) but stay below physical capacity.
    vmem_limit = int(min(max(need + (4 << 20), 32 << 20), cap - (8 << 20)))

    weight_streams = 1 if use_resident else n_row_tiles
    cost = pl.CostEstimate(
        flops=4 * M * D * H + 8 * M * D,   # two matmuls + LN/residual
        transcendentals=M * H,             # sigmoid
        bytes_accessed=int(2 * M * D * xbytes
                           + weight_streams * weight_bytes
                           + 2 * D * xbytes),
    )

    if use_resident:
        out2d = pl.pallas_call(
            ffn_resident_kernel,
            out_shape=jax.ShapeDtypeStruct((Mp, D), x.dtype),
            grid=(n_row_tiles,),
            in_specs=[
                pl.BlockSpec((tm, D), lambda i: (i, 0)),   # x rows
                pl.BlockSpec((1, D), lambda i: (0, 0)),    # gamma
                pl.BlockSpec((1, D), lambda i: (0, 0)),    # beta
                pl.BlockSpec((D, H), lambda i: (0, 0)),    # W1 (resident)
                pl.BlockSpec((1, H), lambda i: (0, 0)),    # b1
                pl.BlockSpec((H, D), lambda i: (0, 0)),    # W2 (resident)
                pl.BlockSpec((1, D), lambda i: (0, 0)),    # b2
            ],
            out_specs=pl.BlockSpec((tm, D), lambda i: (i, 0)),
            compiler_params=pltpu.CompilerParams(
                dimension_semantics=("parallel",),
                vmem_limit_bytes=vmem_limit),
            cost_estimate=cost,
        )(x2d, gamma2d, beta2d, w1, b1_2d, w2, b2_2d)
    else:
        out2d = pl.pallas_call(
            ffn_tiled_kernel,
            out_shape=jax.ShapeDtypeStruct((Mp, D), x.dtype),
            grid=(n_row_tiles, H // th),
            in_specs=[
                pl.BlockSpec((tm, D), lambda i, h: (i, 0)),   # x rows
                pl.BlockSpec((1, D), lambda i, h: (0, 0)),    # gamma
                pl.BlockSpec((1, D), lambda i, h: (0, 0)),    # beta
                pl.BlockSpec((D, th), lambda i, h: (0, h)),   # W1 slice
                pl.BlockSpec((1, th), lambda i, h: (0, h)),   # b1 slice
                pl.BlockSpec((th, D), lambda i, h: (h, 0)),   # W2 slice
                pl.BlockSpec((1, D), lambda i, h: (0, 0)),    # b2
            ],
            out_specs=pl.BlockSpec((tm, D), lambda i, h: (i, 0)),
            scratch_shapes=[
                pltpu.VMEM((tm, D), w1.dtype),     # layernormed rows
                pltpu.VMEM((tm, D), jnp.float32),  # f32 accumulator
            ],
            compiler_params=pltpu.CompilerParams(
                dimension_semantics=("parallel", "arbitrary"),
                vmem_limit_bytes=vmem_limit),
            cost_estimate=cost,
        )(x2d, gamma2d, beta2d, w1, b1_2d, w2, b2_2d)

    if Mp != M:
        out2d = out2d[:M]
    return out2d.reshape(B, T, D)


def _reference(x, gamma, beta, w1, b1, w2, b2):
    xf = x.astype(jnp.float32)
    mean = jnp.mean(xf, axis=-1, keepdims=True)
    var = jnp.mean((xf - mean) ** 2, axis=-1, keepdims=True)
    xn = (xf - mean) * jax.lax.rsqrt(var + LN_EPS) * gamma + beta
    h = xn @ w1 + b1
    h = h * jax.nn.sigmoid(h)
    y = h @ w2 + b2
    return (xf + y).astype(x.dtype)


def _make_params(key, D, H, dtype=jnp.float32):
    kx, kw1, kb1, kw2, kb2 = jax.random.split(key, 5)
    w1 = jax.random.normal(kw1, (D, H), dtype=dtype) * (1.0 / D ** 0.5)
    b1 = jax.random.normal(kb1, (H,), dtype=dtype) * 0.01
    w2 = jax.random.normal(kw2, (H, D), dtype=dtype) * (1.0 / H ** 0.5)
    b2 = jax.random.normal(kb2, (D,), dtype=dtype) * 0.01
    gamma = jnp.ones((D,), dtype=dtype)
    beta = jnp.zeros((D,), dtype=dtype)
    return kx, gamma, beta, w1, b1, w2, b2


if __name__ == "__main__":
    # Small shapes consistent with the module: (batch, seq, embedding).
    B, T, D = 2, 8, 32
    H = 4 * D

    key = jax.random.PRNGKey(0)
    kx, gamma, beta, w1, b1, w2, b2 = _make_params(key, D, H)
    x = jax.random.normal(kx, (B, T, D), dtype=jnp.float32)
    ref = _reference(x, gamma, beta, w1, b1, w2, b2)

    # Path A (VMEM-resident weights), f32: tight correctness check.
    out = jax.block_until_ready(
        feed_forward_block(x, gamma, beta, w1, b1, w2, b2))
    assert out.shape == x.shape and out.dtype == x.dtype
    assert jnp.allclose(out, ref, atol=1e-4, rtol=1e-4)

    # Path B (tiled hidden-dim reduction), same shape, f32: tight check.
    out_t = jax.block_until_ready(
        feed_forward_block(x, gamma, beta, w1, b1, w2, b2,
                           tile_h=128, force_tiled=True))
    assert jnp.allclose(out_t, ref, atol=1e-4, rtol=1e-4)

    # Slightly larger shape exercising a multi-step hidden reduction
    # (D=64, H=256, tile_h=128 -> 2 hidden steps).  Tiled vs resident should
    # agree to f32 accumulation noise; both agree with the pure-JAX reference.
    D2, H2 = 64, 256
    kx2, gamma2, beta2, w1_2, b1_2, w2_2, b2_2 = _make_params(
        jax.random.PRNGKey(1), D2, H2)
    x2 = jax.random.normal(kx2, (B, T, D2), dtype=jnp.float32)
    ref2 = _reference(x2, gamma2, beta2, w1_2, b1_2, w2_2, b2_2)
    out2_res = jax.block_until_ready(
        feed_forward_block(x2, gamma2, beta2, w1_2, b1_2, w2_2, b2_2))
    out2_til = jax.block_until_ready(
        feed_forward_block(x2, gamma2, beta2, w1_2, b1_2, w2_2, b2_2,
                           tile_h=128, force_tiled=True))
    assert jnp.allclose(out2_til, out2_res, atol=1e-5, rtol=1e-5)
    assert jnp.allclose(out2_res, ref2, atol=2e-4, rtol=2e-4)

    # bf16 weights/activations path (full-rate MXU): smoke test.
    outb = feed_forward_block(
        x.astype(jnp.bfloat16),
        gamma.astype(jnp.bfloat16), beta.astype(jnp.bfloat16),
        w1.astype(jnp.bfloat16), b1.astype(jnp.bfloat16),
        w2.astype(jnp.bfloat16), b2.astype(jnp.bfloat16))
    outb = jax.block_until_ready(outb)
    assert outb.shape == x.shape and outb.dtype == jnp.bfloat16
    assert bool(jnp.all(jnp.isfinite(outb.astype(jnp.float32))))

    print("KERNEL_OK")
</pallas_src>

<mosaic_0001>
module attributes {stable_mosaic.version = 11 : i64} {
  func.func @ffn_resident_kernel(%arg0: i32, %arg1: memref<16x32xf32, #tpu.memory_space<vmem>>, %arg2: memref<1x32xf32, #tpu.memory_space<vmem>>, %arg3: memref<1x32xf32, #tpu.memory_space<vmem>>, %arg4: memref<32x128xf32, #tpu.memory_space<vmem>>, %arg5: memref<1x128xf32, #tpu.memory_space<vmem>>, %arg6: memref<128x32xf32, #tpu.memory_space<vmem>>, %arg7: memref<1x32xf32, #tpu.memory_space<vmem>>, %arg8: memref<16x32xf32, #tpu.memory_space<vmem>>) attributes {dimension_semantics = [#tpu.dimension_semantics<parallel>], iteration_bounds = array<i64: 1>, scalar_prefetch = 0 : i64, scratch_operands = 0 : i64, tpu.core_type = #tpu.core_type<tc>, window_params = [{transform_indices = @transform_0, window_bounds = array<i64: 16, 32>}, {pipeline_mode = #tpu.pipeline_mode<synchronous>, transform_indices = @transform_1, window_bounds = array<i64: 1, 32>}, {pipeline_mode = #tpu.pipeline_mode<synchronous>, transform_indices = @transform_2, window_bounds = array<i64: 1, 32>}, {pipeline_mode = #tpu.pipeline_mode<synchronous>, transform_indices = @transform_3, window_bounds = array<i64: 32, 128>}, {pipeline_mode = #tpu.pipeline_mode<synchronous>, transform_indices = @transform_4, window_bounds = array<i64: 1, 128>}, {pipeline_mode = #tpu.pipeline_mode<synchronous>, transform_indices = @transform_5, window_bounds = array<i64: 128, 32>}, {pipeline_mode = #tpu.pipeline_mode<synchronous>, transform_indices = @transform_6, window_bounds = array<i64: 1, 32>}, {transform_indices = @transform_7, window_bounds = array<i64: 16, 32>}]} {
    %c0 = arith.constant 0 : index
    %c0_0 = arith.constant 0 : index
    %0 = vector.load %arg1[%c0, %c0_0] : memref<16x32xf32, #tpu.memory_space<vmem>>, vector<16x32xf32>
    %c0_1 = arith.constant 0 : index
    %c0_2 = arith.constant 0 : index
    %1 = vector.load %arg2[%c0_1, %c0_2] : memref<1x32xf32, #tpu.memory_space<vmem>>, vector<1x32xf32>
    %c0_3 = arith.constant 0 : index
    %c0_4 = arith.constant 0 : index
    %2 = vector.load %arg3[%c0_3, %c0_4] : memref<1x32xf32, #tpu.memory_space<vmem>>, vector<1x32xf32>
    %cst = arith.constant dense<0.000000e+00> : vector<16xf32>
    %3 = vector.multi_reduction <add>, %0, %cst [1] : vector<16x32xf32> to vector<16xf32>
    %4 = vector.shape_cast %3 : vector<16xf32> to vector<16x1xf32>
    %cst_5 = arith.constant 3.200000e+01 : f32
    %5 = vector.broadcast %cst_5 : f32 to vector<16x1xf32>
    %6 = arith.divf %4, %5 : vector<16x1xf32>
    %7 = vector.broadcast %6 : vector<16x1xf32> to vector<16x32xf32>
    %8 = arith.subf %0, %7 : vector<16x32xf32>
    %9 = arith.mulf %8, %8 : vector<16x32xf32>
    %cst_6 = arith.constant dense<0.000000e+00> : vector<16xf32>
    %10 = vector.multi_reduction <add>, %9, %cst_6 [1] : vector<16x32xf32> to vector<16xf32>
    %11 = vector.shape_cast %10 : vector<16xf32> to vector<16x1xf32>
    %cst_7 = arith.constant 3.200000e+01 : f32
    %12 = vector.broadcast %cst_7 : f32 to vector<16x1xf32>
    %13 = arith.divf %11, %12 : vector<16x1xf32>
    %cst_8 = arith.constant 9.99999974E-6 : f32
    %14 = vector.broadcast %cst_8 : f32 to vector<16x1xf32>
    %15 = arith.addf %13, %14 : vector<16x1xf32>
    %16 = math.rsqrt %15 : vector<16x1xf32>
    %17 = vector.broadcast %16 : vector<16x1xf32> to vector<16x32xf32>
    %18 = arith.mulf %8, %17 : vector<16x32xf32>
    %19 = vector.broadcast %1 : vector<1x32xf32> to vector<16x32xf32>
    %20 = arith.mulf %18, %19 : vector<16x32xf32>
    %21 = vector.broadcast %2 : vector<1x32xf32> to vector<16x32xf32>
    %22 = arith.addf %20, %21 : vector<16x32xf32>
    %c0_9 = arith.constant 0 : index
    %c0_10 = arith.constant 0 : index
    %23 = vector.load %arg4[%c0_9, %c0_10] : memref<32x128xf32, #tpu.memory_space<vmem>>, vector<32x128xf32>
    %cst_11 = arith.constant dense<0.000000e+00> : vector<16x128xf32>
    %24 = tpu.matmul %22, %23, %cst_11 {dimension_numbers = #tpu.dot_dimension_numbers<[1], [0], [0], [1], [0, 0, 1, 1], [], []>} : vector<16x32xf32>, vector<32x128xf32>, vector<16x128xf32> -> vector<16x128xf32>
    %c0_12 = arith.constant 0 : index
    %c0_13 = arith.constant 0 : index
    %25 = vector.load %arg5[%c0_12, %c0_13] : memref<1x128xf32, #tpu.memory_space<vmem>>, vector<1x128xf32>
    %26 = vector.broadcast %25 : vector<1x128xf32> to vector<16x128xf32>
    %27 = arith.addf %24, %26 : vector<16x128xf32>
    %28 = arith.negf %27 : vector<16x128xf32>
    %29 = math.exp %28 : vector<16x128xf32>
    %cst_14 = arith.constant 1.000000e+00 : f32
    %30 = vector.broadcast %cst_14 : f32 to vector<16x128xf32>
    %31 = arith.addf %30, %29 : vector<16x128xf32>
    %32 = arith.divf %30, %31 : vector<16x128xf32>
    %33 = arith.mulf %27, %32 : vector<16x128xf32>
    %c0_15 = arith.constant 0 : index
    %c0_16 = arith.constant 0 : index
    %34 = vector.load %arg6[%c0_15, %c0_16] : memref<128x32xf32, #tpu.memory_space<vmem>>, vector<128x32xf32>
    %cst_17 = arith.constant dense<0.000000e+00> : vector<16x32xf32>
    %35 = tpu.matmul %33, %34, %cst_17 {dimension_numbers = #tpu.dot_dimension_numbers<[1], [0], [0], [1], [0, 0, 1, 1], [], []>} : vector<16x128xf32>, vector<128x32xf32>, vector<16x32xf32> -> vector<16x32xf32>
    %c0_18 = arith.constant 0 : index
    %c0_19 = arith.constant 0 : index
    %36 = vector.load %arg7[%c0_18, %c0_19] : memref<1x32xf32, #tpu.memory_space<vmem>>, vector<1x32xf32>
    %37 = vector.broadcast %36 : vector<1x32xf32> to vector<16x32xf32>
    %38 = arith.addf %35, %37 : vector<16x32xf32>
    %c0_20 = arith.constant 0 : index
    %c0_21 = arith.constant 0 : index
    %39 = vector.load %arg1[%c0_20, %c0_21] : memref<16x32xf32, #tpu.memory_space<vmem>>, vector<16x32xf32>
    %40 = arith.addf %39, %38 : vector<16x32xf32>
    %c0_22 = arith.constant 0 : index
    %c0_23 = arith.constant 0 : index
    %41 = vector.load %arg8[%c0_22, %c0_23] : memref<16x32xf32, #tpu.memory_space<vmem>>, vector<16x32xf32>
    tpu.vector_store %arg8[%c0_22, %c0_23], %40 {strides = array<i32>} : memref<16x32xf32, #tpu.memory_space<vmem>>, vector<16x32xf32>,
    return
  }
  func.func @transform_0(%arg0: i32) -> (i32, i32) {
    %c0_i32 = arith.constant 0 : i32
    %c0_i32_0 = arith.constant 0 : i32
    return %arg0, %c0_i32 : i32, i32
  }
  func.func @transform_1(%arg0: i32) -> (i32, i32) {
    %c0_i32 = arith.constant 0 : i32
    %c0_i32_0 = arith.constant 0 : i32
    %c0_i32_1 = arith.constant 0 : i32
    return %c0_i32, %c0_i32_0 : i32, i32
  }
  func.func @transform_2(%arg0: i32) -> (i32, i32) {
    %c0_i32 = arith.constant 0 : i32
    %c0_i32_0 = arith.constant 0 : i32
    %c0_i32_1 = arith.constant 0 : i32
    return %c0_i32, %c0_i32_0 : i32, i32
  }
  func.func @transform_3(%arg0: i32) -> (i32, i32) {
    %c0_i32 = arith.constant 0 : i32
    %c0_i32_0 = arith.constant 0 : i32
    %c0_i32_1 = arith.constant 0 : i32
    return %c0_i32, %c0_i32_0 : i32, i32
  }
  func.func @transform_4(%arg0: i32) -> (i32, i32) {
    %c0_i32 = arith.constant 0 : i32
    %c0_i32_0 = arith.constant 0 : i32
    %c0_i32_1 = arith.constant 0 : i32
    return %c0_i32, %c0_i32_0 : i32, i32
  }
  func.func @transform_5(%arg0: i32) -> (i32, i32) {
    %c0_i32 = arith.constant 0 : i32
    %c0_i32_0 = arith.constant 0 : i32
    %c0_i32_1 = arith.constant 0 : i32
    return %c0_i32, %c0_i32_0 : i32, i32
  }
  func.func @transform_6(%arg0: i32) -> (i32, i32) {
    %c0_i32 = arith.constant 0 : i32
    %c0_i32_0 = arith.constant 0 : i32
    %c0_i32_1 = arith.constant 0 : i32
    return %c0_i32, %c0_i32_0 : i32, i32
  }
  func.func @transform_7(%arg0: i32) -> (i32, i32) {
    %c0_i32 = arith.constant 0 : i32
    %c0_i32_0 = arith.constant 0 : i32
    return %arg0, %c0_i32 : i32, i32
  }
}

</mosaic_0001>

<llo_original>
// kernel: feed_forward_block.1
$region0: #{feed_forward_block.1}
  #allocation0 [shape = 'u32[]', space=smem, size = 0x4, offset = 0x4, fixed_abs, tag = 'smem constant byte address 0x4 - core index']
  #allocation1 [shape = 'u32[144,128]{1,0:T(1,128)}', space=vmem, size = 0x12000, scoped, tag = 'internal scratch']
  %s0 = inlined_call_operand.vmem [shape: f32[16,32], index: 0, kind: input, shape index: {}]
  %s1 = inlined_call_operand.vmem [shape: f32[1,32], index: 1, kind: input, shape index: {}]
  %s2 = inlined_call_operand.vmem [shape: f32[1,32], index: 2, kind: input, shape index: {}]
  %s3 = inlined_call_operand.vmem [shape: f32[32,128], index: 3, kind: input, shape index: {}]
  %s4 = inlined_call_operand.vmem [shape: f32[1,128], index: 4, kind: input, shape index: {}]
  %s5 = inlined_call_operand.vmem [shape: f32[128,32], index: 5, kind: input, shape index: {}]
  %s6 = inlined_call_operand.vmem [shape: f32[1,32], index: 6, kind: input, shape index: {}]
  %s7 = inlined_call_operand.hbm [shape: f32[16,32], index: 7, kind: output, shape index: {}]
  %s8 = sld [smem:[#allocation0]]
  $region38: #{feed_forward_block.1} parent=0
    _
  %s10 = ssub.s32 1, %s8
  %s11 = scalar_select 0, %s10, %s8
  $region1: #{feed_forward_block.1} parent=0
    #allocation2 [shape = 'u8[8192]{0}', space=vmem, size = 0x2000, scoped, tag = 'output window, operand 0, single buffered']
    #allocation3 [shape = 's32[1]{0}', space=sflag, size = 0x4, scoped, tag = 'scoped memory for feed_forward_block.1']
    %12 = vsyncpa [#allocation3], 0
    // Predicated region
    $region2: #{feed_forward_block.1} parent=1 // pred_check
      _
    $region3: #{feed_forward_block.1} parent=1 // pred_check_branch
      %14 = sbr.rel (0) target = $region5
    $region4: #{feed_forward_block.1} parent=1 // pred_region
      _
    $region5: #{feed_forward_block.1} parent=1 // pred_fallthru
      _
    // Predicated region
    $region6: #{feed_forward_block.1} parent=1 // pred_check
      _
    $region7: #{feed_forward_block.1} parent=1 // pred_check_branch
      %16 = sbr.rel (0) target = $region9
    $region8: #{feed_forward_block.1} parent=1 // pred_region
      _
    $region9: #{feed_forward_block.1} parent=1 // pred_fallthru
      _
    // Predicated region
    $region10: #{feed_forward_block.1} parent=1 // pred_check
      _
    $region11: #{feed_forward_block.1} parent=1 // pred_check_branch
      %18 = sbr.rel (0) target = $region13
    $region12: #{feed_forward_block.1} parent=1 // pred_region
      _
    $region13: #{feed_forward_block.1} parent=1 // pred_fallthru
      _
    // Predicated region
    $region14: #{feed_forward_block.1} parent=1 // pred_check
      _
    $region15: #{feed_forward_block.1} parent=1 // pred_check_branch
      %20 = sbr.rel (0) target = $region17
    $region16: #{feed_forward_block.1} parent=1 // pred_region
      _
    $region17: #{feed_forward_block.1} parent=1 // pred_fallthru
      _
    // Predicated region
    $region18: #{feed_forward_block.1} parent=1 // pred_check
      _
    $region19: #{feed_forward_block.1} parent=1 // pred_check_branch
      %22 = sbr.rel (0) target = $region21
    $region20: #{feed_forward_block.1} parent=1 // pred_region
      _
    $region21: #{feed_forward_block.1} parent=1 // pred_fallthru
      _
    // Predicated region
    $region22: #{feed_forward_block.1} parent=1 // pred_check
      _
    $region23: #{feed_forward_block.1} parent=1 // pred_check_branch
      %24 = sbr.rel (0) target = $region25
    $region24: #{feed_forward_block.1} parent=1 // pred_region
      _
    $region25: #{feed_forward_block.1} parent=1 // pred_fallthru
      _
    // Predicated region
    $region26: #{feed_forward_block.1} parent=1 // pred_check
      _
    $region27: #{feed_forward_block.1} parent=1 // pred_check_branch
      %26 = sbr.rel (0) target = $region29
    $region28: #{feed_forward_block.1} parent=1 // pred_region
      _
    $region29: #{feed_forward_block.1} parent=1 // pred_fallthru
      _
    %v27 = vld [vmem:[%s0] sm:$0xff]
    %v28 = vld [vmem:[%s0 + $0x8] sm:$0xff]
    %v29 = vld [vmem:[%s1] sm:$0x1]
    %v30 = vld [vmem:[%s2] sm:$0x1]
    %vm31 = vcmask 261120
    %v32 = vsel %vm31, %v27, 0.0
    %33 = vadd.xlane.f32.xlu0 %v32
    %v34 = vpop.xlane.xlu0 %33
    %v35 = vsel %vm31, %v28, 0.0
    %36 = vadd.xlane.f32.xlu0 %v35
    %v37 = vpop.xlane.xlu0 %36
    %v38 = vrcp.pop 32.0
    %v39 = vmul.f32 %v34, %v38
    %v40 = vmul.f32 %v37, %v38
    %v41 = vsub.f32 %v27, %v39
    %v42 = vsub.f32 %v28, %v40
    %v43 = vmul.f32 %v41, %v41
    %v44 = vmul.f32 %v42, %v42
    %v45 = vsel %vm31, %v43, 0.0
    %46 = vadd.xlane.f32.xlu0 %v45
    %v47 = vpop.xlane.xlu0 %46
    %v48 = vsel %vm31, %v44, 0.0
    %49 = vadd.xlane.f32.xlu0 %v48
    %v50 = vpop.xlane.xlu0 %49
    %v51 = vmul.f32 %v47, %v38
    %v52 = vmul.f32 %v50, %v38
    %v53 = vadd.f32 %v51, 1e-05
    %v54 = vadd.f32 %v52, 1e-05
    %v55 = vrsqrt.pop %v53
    %v56 = vrsqrt.pop %v54
    %v57 = vmul.f32 %v41, %v55
    %v58 = vmul.f32 %v42, %v56
    %v60 = vlaneseq
    %v61 = vshrl.u32 %v60, 7
    %v62 = vsub.s32 0, %v61
    %v63 = vrot.slane %v29, %v62
    %v65 = vmul.f32 %v57, %v63
    %v66 = vmul.f32 %v58, %v63
    %v68 = vlaneseq
    %v69 = vshrl.u32 %v68, 7
    %v70 = vsub.s32 0, %v69
    %v71 = vrot.slane %v30, %v70
    %v73 = vadd.f32 %v65, %v71
    %v74 = vadd.f32 %v66, %v71
    %v75 = vld [vmem:[%s3] sm:$0xff]
    %v76 = vld [vmem:[%s3 + $0x8] sm:$0xff]
    %v77 = vld [vmem:[%s3 + $0x10] sm:$0xff]
    %v78 = vld [vmem:[%s3 + $0x18] sm:$0xff]
    %v79 = vld [vmem:[%s4] sm:$0x1]
    %v81 = vlaneseq
    %v82 = vshrl.u32 %v81, 7
    %v83 = vsub.s32 0, %v82
    %v84 = vrot.slane %v79, %v83
    %v87 = vsel %vm31, %v73, 0
    %v90 = vsel %vm31, %v74, 0
    %92 = vmatprep.subr.mxu0 0.0
    %93 = vmatpush1.msra.mxu0 0.0
    %94 = vmatprep.subr.mxu0 0.0
    %95 = vmatpush1.msra.mxu0 0.0
    %96 = vmatprep.subr.mxu0 0.0
    %97 = vmatpush1.msra.mxu0 0.0
    %98 = vmatprep.subr.mxu0 0.0
    %99 = vmatpush1.msra.mxu0 0.0
    %100 = vmatprep.subr.mxu0 0.0
    %101 = vmatpush1.msra.mxu0 0.0
    %102 = vmatprep.subr.mxu0 0.0
    %103 = vmatpush1.msra.mxu0 0.0
    %104 = vmatprep.subr.mxu0 0.0
    %105 = vmatpush1.msra.mxu0 0.0
    %106 = vmatprep.subr.mxu0 0.0
    %107 = vmatpush1.msra.mxu0 0.0
    %108 = vmatprep.subr.mxu0 0.0
    %109 = vmatpush1.msra.mxu0 0.0
    %110 = vmatprep.subr.mxu0 0.0
    %111 = vmatpush1.msra.mxu0 0.0
    %112 = vmatprep.subr.mxu0 0.0
    %113 = vmatpush1.msra.mxu0 0.0
    %114 = vmatprep.subr.mxu0 0.0
    %115 = vmatpush1.msra.mxu0 0.0
    %116 = vmatprep.subr.mxu0 0.0
    %117 = vmatpush1.msra.mxu0 %v78
    %118 = vmatprep.subr.mxu0 0.0
    %119 = vmatpush1.msra.mxu0 %v77
    %120 = vmatprep.subr.mxu0 0.0
    %121 = vmatpush1.msra.mxu0 %v76
    %122 = vmatprep.subr.mxu0 0.0
    %123 = vmatpush1.msra.mxu0 %v75
    %124 = vmatprep.subr.mxu0 0.0
    %125 = vmatpush2.msra.mxu0 0.0
    %126 = vmatprep.subr.mxu0 0.0
    %127 = vmatpush2.msra.mxu0 0.0
    %128 = vmatprep.subr.mxu0 0.0
    %129 = vmatpush2.msra.mxu0 0.0
    %130 = vmatprep.subr.mxu0 0.0
    %131 = vmatpush2.msra.mxu0 0.0
    %132 = vmatprep.subr.mxu0 0.0
    %133 = vmatpush2.msra.mxu0 0.0
    %134 = vmatprep.subr.mxu0 0.0
    %135 = vmatpush2.msra.mxu0 0.0
    %136 = vmatprep.subr.mxu0 0.0
    %137 = vmatpush2.msra.mxu0 0.0
    %138 = vmatprep.subr.mxu0 0.0
    %139 = vmatpush2.msra.mxu0 0.0
    %140 = vmatprep.subr.mxu0 0.0
    %141 = vmatpush2.msra.mxu0 0.0
    %142 = vmatprep.subr.mxu0 0.0
    %143 = vmatpush2.msra.mxu0 0.0
    %144 = vmatprep.subr.mxu0 0.0
    %145 = vmatpush2.msra.mxu0 0.0
    %146 = vmatprep.subr.mxu0 0.0
    %147 = vmatpush2.msra.mxu0 0.0
    %148 = vmatprep.subr.mxu0 0.0
    %149 = vmatpush2.msra.mxu0 0.0
    %150 = vmatprep.subr.mxu0 0.0
    %151 = vmatpush2.msra.mxu0 0.0
    %152 = vmatprep.subr.mxu0 0.0
    %153 = vmatpush2.msra.mxu0 0.0
    %154 = vmatprep.subr.mxu0 0.0
    %155 = vmatpush2.msra.mxu0 0.0
    %156 = vmatprep.mubr.f32.mxu0 0.0
    %157 = vmatmul.mubr.f32.gmra.mxu0 %v87
    %v158 = vpop.f32.mrf.mxu0
    %v159 = vadd.f32 %v84, %v158
    %v160 = vpop.f32.mrf.mxu0
    %161 = vmatprep.mubr.f32.mxu0 0.0
    %162 = vmatmul.mubr.f32.gmra.mxu0 %v90
    %v163 = vpop.f32.mrf.mxu0
    %v164 = vadd.f32 %v84, %v163
    %v165 = vpop.f32.mrf.mxu0
    %166 = vdwg.mxu0
    %v167 = vxor.u32 %v159, 2147483648
    %v168 = vxor.u32 %v164, 2147483648
    %v169 = vmul.f32 %v167, 1.442695
    %v170 = vpow.pop %v169
    %v171 = vmul.f32 %v168, 1.442695
    %v172 = vpow.pop %v171
    %v173 = vadd.f32 %v170, 1.0
    %v174 = vadd.f32 %v172, 1.0
    %v175 = vrcp.pop %v173
    %v176 = vmul.f32 1.0, %v175
    %v177 = vrcp.pop %v174
    %v178 = vmul.f32 1.0, %v177
    %v179 = vmul.f32 %v159, %v176
    %v180 = vmul.f32 %v164, %v178
    %v181 = vld [vmem:[%s5] sm:$0xff]
    %v182 = vld [vmem:[%s5 + $0x8] sm:$0xff]
    %v183 = vld [vmem:[%s5 + $0x10] sm:$0xff]
    %v184 = vld [vmem:[%s5 + $0x18] sm:$0xff]
    %v185 = vld [vmem:[%s5 + $0x20] sm:$0xff]
    %v186 = vld [vmem:[%s5 + $0x28] sm:$0xff]
    %v187 = vld [vmem:[%s5 + $0x30] sm:$0xff]
    %v188 = vld [vmem:[%s5 + $0x38] sm:$0xff]
    %v189 = vld [vmem:[%s5 + $0x40] sm:$0xff]
    %v190 = vld [vmem:[%s5 + $0x48] sm:$0xff]
    %v191 = vld [vmem:[%s5 + $0x50] sm:$0xff]
    %v192 = vld [vmem:[%s5 + $0x58] sm:$0xff]
    %v193 = vld [vmem:[%s5 + $0x60] sm:$0xff]
    %v194 = vld [vmem:[%s5 + $0x68] sm:$0xff]
    %v195 = vld [vmem:[%s5 + $0x70] sm:$0xff]
    %v196 = vld [vmem:[%s5 + $0x78] sm:$0xff]
    %v197 = vld [vmem:[%s6] sm:$0x1]
    %v199 = vlaneseq
    %v200 = vshrl.u32 %v199, 7
    %v201 = vsub.s32 0, %v200
    %v202 = vrot.slane %v197, %v201
    %204 = vmatprep.subr.mxu0 0.0
    %205 = vmatpush1.msra.mxu0 %v196
    %206 = vmatprep.subr.mxu0 0.0
    %207 = vmatpush1.msra.mxu0 %v195
    %208 = vmatprep.subr.mxu0 0.0
    %209 = vmatpush1.msra.mxu0 %v194
    %210 = vmatprep.subr.mxu0 0.0
    %211 = vmatpush1.msra.mxu0 %v193
    %212 = vmatprep.subr.mxu0 0.0
    %213 = vmatpush1.msra.mxu0 %v192
    %214 = vmatprep.subr.mxu0 0.0
    %215 = vmatpush1.msra.mxu0 %v191
    %216 = vmatprep.subr.mxu0 0.0
    %217 = vmatpush1.msra.mxu0 %v190
    %218 = vmatprep.subr.mxu0 0.0
    %219 = vmatpush1.msra.mxu0 %v189
    %220 = vmatprep.subr.mxu0 0.0
    %221 = vmatpush1.msra.mxu0 %v188
    %222 = vmatprep.subr.mxu0 0.0
    %223 = vmatpush1.msra.mxu0 %v187
    %224 = vmatprep.subr.mxu0 0.0
    %225 = vmatpush1.msra.mxu0 %v186
    %226 = vmatprep.subr.mxu0 0.0
    %227 = vmatpush1.msra.mxu0 %v185
    %228 = vmatprep.subr.mxu0 0.0
    %229 = vmatpush1.msra.mxu0 %v184
    %230 = vmatprep.subr.mxu0 0.0
    %231 = vmatpush1.msra.mxu0 %v183
    %232 = vmatprep.subr.mxu0 0.0
    %233 = vmatpush1.msra.mxu0 %v182
    %234 = vmatprep.subr.mxu0 0.0
    %235 = vmatpush1.msra.mxu0 %v181
    %236 = vmatprep.subr.mxu0 0.0
    %237 = vmatpush2.msra.mxu0 0.0
    %238 = vmatprep.subr.mxu0 0.0
    %239 = vmatpush2.msra.mxu0 0.0
    %240 = vmatprep.subr.mxu0 0.0
    %241 = vmatpush2.msra.mxu0 0.0
    %242 = vmatprep.subr.mxu0 0.0
    %243 = vmatpush2.msra.mxu0 0.0
    %244 = vmatprep.subr.mxu0 0.0
    %245 = vmatpush2.msra.mxu0 0.0
    %246 = vmatprep.subr.mxu0 0.0
    %247 = vmatpush2.msra.mxu0 0.0
    %248 = vmatprep.subr.mxu0 0.0
    %249 = vmatpush2.msra.mxu0 0.0
    %250 = vmatprep.subr.mxu0 0.0
    %251 = vmatpush2.msra.mxu0 0.0
    %252 = vmatprep.subr.mxu0 0.0
    %253 = vmatpush2.msra.mxu0 0.0
    %254 = vmatprep.subr.mxu0 0.0
    %255 = vmatpush2.msra.mxu0 0.0
    %256 = vmatprep.subr.mxu0 0.0
    %257 = vmatpush2.msra.mxu0 0.0
    %258 = vmatprep.subr.mxu0 0.0
    %259 = vmatpush2.msra.mxu0 0.0
    %260 = vmatprep.subr.mxu0 0.0
    %261 = vmatpush2.msra.mxu0 0.0
    %262 = vmatprep.subr.mxu0 0.0
    %263 = vmatpush2.msra.mxu0 0.0
    %264 = vmatprep.subr.mxu0 0.0
    %265 = vmatpush2.msra.mxu0 0.0
    %266 = vmatprep.subr.mxu0 0.0
    %267 = vmatpush2.msra.mxu0 0.0
    %268 = vmatprep.mubr.f32.mxu0 0.0
    %269 = vmatmul.mubr.f32.gmra.mxu0 %v179
    %v270 = vpop.f32.mrf.mxu0
    %v271 = vadd.f32 %v202, %v270
    %v272 = vpop.f32.mrf.mxu0
    %273 = vmatprep.mubr.f32.mxu0 0.0
    %274 = vmatmul.mubr.f32.gmra.mxu0 %v180
    %v275 = vpop.f32.mrf.mxu0
    %v276 = vadd.f32 %v202, %v275
    %v277 = vpop.f32.mrf.mxu0
    %278 = vdwg.mxu0
    %v279 = vadd.f32 %v27, %v271
    %v280 = vadd.f32 %v28, %v276
    %281 = vst.msk [vmem:[#allocation2] sm:$0xff] %vm31, %v279
    %282 = vst.msk [vmem:[#allocation2 + $0x8] sm:$0xff] %vm31, %v280
    // Predicated region
    $region30: #{feed_forward_block.1} parent=1 // pred_check
      _
    $region31: #{feed_forward_block.1} parent=1 // pred_check_branch
      %284 = sbr.rel (0) target = $region33
    $region32: #{feed_forward_block.1} parent=1 // pred_region
      %s286 = ssub.s32 256, 256
      %287 = vsyncadd [#allocation3], %s286
      %s288 = sshll.u32 [#allocation2], 4
      %s289 = int_to_ptr.vmem [resolvable:$true] %s288
      %294 = dma.vmem_to_hbm [thread:$0]  %s289, 256, %s7, [#allocation3], 128, 128, 8
    $region33: #{feed_forward_block.1} parent=1 // pred_fallthru
      _
    // Predicated region
    $region34: #{feed_forward_block.1} parent=1 // pred_check
      _
    $region35: #{feed_forward_block.1} parent=1 // pred_check_branch
      %296 = sbr.rel (0) target = $region37
    $region36: #{feed_forward_block.1} parent=1 // pred_region
      %297 = dma.done [#allocation3], 256
    $region37: #{feed_forward_block.1} parent=1 // pred_fallthru
      _
    %298 = vsyncpa [#allocation3], 1

</llo_original>
